<compile_context>
chip_gen: v7x
topology: tpu7x:2x2x1
jax: 0.10.0
libtpu: 0.0.40
codegen_flags: <defaults>
</compile_context>

<pallas_src>
import functools

import jax
import jax.numpy as jnp
import numpy as np
from jax.experimental import pallas as pl
from jax.experimental.pallas import tpu as pltpu


def conv_transpose1d_pallas(x, w, b, stride, *, tl=512):
    """x: (N, H, L), w: (H, 1, K), b: (1,)  ->  (N, 1, L_out)."""
    N, H, L = x.shape
    K = w.shape[-1]
    L_out = (L - 1) * stride + K

    Q = -(-K // stride)            # kernel taps per output phase, ceil(K / stride)
    K_pad = Q * stride             # pad taps so they split into Q groups of `stride`
    Qm1 = Q - 1                    # overlap-add halo (rows spilling into the next tile)
    CW = 128                       # carry width: one lane group
    assert Qm1 <= CW, "kernel_size/stride ratio too large for single-vreg carry"

    R_needed = L + Qm1                                       # output rows (time positions / stride)
    TL = max(128, min(tl, ((R_needed + 127) // 128) * 128))  # lane-dense time tile (mult. of 128)
    num_tiles = -(-R_needed // TL)
    R = num_tiles * TL

    dt = x.dtype
    # Tiny parameter glue (negligible traffic): (H, 1, K) -> (K_pad, H) with zero-padded taps.
    w_kh = jnp.pad(jnp.transpose(w[:, 0, :], (1, 0)), ((0, K_pad - K), (0, 0))).astype(dt)
    b_sc = jnp.reshape(b, (1,)).astype(jnp.float32)

    # For tiny inputs, zero-pad the time axis once so every input block is fully in bounds.
    x_in = x if L >= TL else jnp.pad(x, ((0, 0), (0, 0), (0, TL - L)))
    L_in = x_in.shape[-1]
    last_in_tile = max(0, -(-L_in // TL) - 1)   # clamp target for (rare) fully-out-of-range tiles

    def kernel(x_ref, w_ref, b_ref, o_ref, carry_ref):
        # x_ref: (1, H, TL), w_ref: (K_pad, H), b_ref: (1,) SMEM,
        # o_ref: (1, stride, TL), carry_ref: (stride, CW) f32 scratch (persists across tiles).
        t = pl.program_id(1)

        @pl.when(t == 0)
        def _():
            carry_ref[...] = jnp.zeros_like(carry_ref)

        # Hidden-dim reduction on the MXU, time on the 128-lane axis.
        contrib = jnp.dot(w_ref[...], x_ref[0],
                          preferred_element_type=jnp.float32)          # (K_pad, TL) f32
        # Zero contributions from out-of-range / padded input columns.
        col = jax.lax.broadcasted_iota(jnp.int32, (K_pad, TL), 1) + t * TL
        contrib = jnp.where(col < L, contrib, 0.0)

        lane = jax.lax.broadcasted_iota(jnp.int32, (stride, TL), 1)
        lane_c = jax.lax.broadcasted_iota(jnp.int32, (stride, CW), 1)

        # Overlap-add in registers: out[r, p] = sum_q contrib[q*stride + r, p - q].
        # Lane shifts go to the XLU; a single fused store writes the tile.
        main = contrib[0:stride, :]                       # q = 0 (no shift)
        carry_new = jnp.zeros((stride, CW), jnp.float32)
        for q in range(1, Q):                             # Q is small & static
            sl = contrib[q * stride:(q + 1) * stride, :]  # (stride, TL)
            rolled = pltpu.roll(sl, shift=q, axis=1)
            main = main + jnp.where(lane >= q, rolled, 0.0)
            # Wrapped-around lanes are this tile's spill into the next tile's first q rows.
            carry_new = carry_new + jnp.where(lane_c < q, rolled[:, 0:CW], 0.0)

        carry_prev = carry_ref[...]
        carry_ref[...] = carry_new

        if TL > CW:
            carry_wide = jnp.concatenate(
                [carry_prev, jnp.zeros((stride, TL - CW), jnp.float32)], axis=1)
        else:
            carry_wide = carry_prev
        # Bias folded into the single store; no separate accumulator scratch.
        o_ref[0] = (main + carry_wide + b_ref[0]).astype(o_ref.dtype)

    out_padded = pl.pallas_call(
        kernel,
        out_shape=jax.ShapeDtypeStruct((N, stride, R), dt),
        grid=(N, num_tiles),
        in_specs=[
            pl.BlockSpec((1, H, TL),
                         lambda n, t: (n, 0, jnp.minimum(t, last_in_tile))),
            pl.BlockSpec((K_pad, H), lambda n, t: (0, 0)),
            pl.BlockSpec(memory_space=pltpu.MemorySpace.SMEM),
        ],
        out_specs=pl.BlockSpec((1, stride, TL), lambda n, t: (n, 0, t)),
        scratch_shapes=[pltpu.VMEM((stride, CW), jnp.float32)],
        compiler_params=pltpu.CompilerParams(
            # Batch axis shards across cores; the time-tile axis must stay sequential
            # because the carry scratch chains adjacent tiles (overlap-add halo).
            dimension_semantics=("parallel", "arbitrary")),
    )(x_in, w_kh, b_sc)

    # Cheap glue on the (H-times smaller) output: interleave phases back to 1-D time and trim.
    out_flat = jnp.transpose(out_padded, (0, 2, 1)).reshape(N, R * stride)
    return out_flat[:, :L_out].reshape(N, 1, L_out)


def ref_conv_transpose1d(x, w, b, stride):
    """Pure-JAX reference matching torch.nn.ConvTranspose1d semantics."""
    N, H, L = x.shape
    K = w.shape[-1]
    L_out = (L - 1) * stride + K
    out = jnp.zeros((N, 1, L_out), jnp.float32) + b[None, :, None]
    for i in range(L):
        for k in range(K):
            val = jnp.einsum("nc,c->n", x[:, :, i], w[:, 0, k])
            out = out.at[:, 0, i * stride + k].add(val)
    return out


if __name__ == "__main__":
    # Small shapes consistent with the module.
    batch = 2
    hidden_size = 32
    seq_len = 8
    kernel_size = 4
    stride = 2

    key = jax.random.PRNGKey(0)
    kx, kw, kb = jax.random.split(key, 3)

    # Deterministic synthetic parameters (shapes match nn.ConvTranspose1d(H, 1, K, stride)).
    x = jax.random.normal(kx, (batch, hidden_size, seq_len), jnp.float32)
    w = jax.random.normal(kw, (hidden_size, 1, kernel_size), jnp.float32) * 0.1
    b = jax.random.normal(kb, (1,), jnp.float32) * 0.1

    fwd = jax.jit(functools.partial(conv_transpose1d_pallas, stride=stride))
    y = fwd(x, w, b)
    jax.block_until_ready(y)

    y_ref = ref_conv_transpose1d(x, w, b, stride)
    np.testing.assert_allclose(np.asarray(y), np.asarray(y_ref), rtol=1e-5, atol=1e-5)
    assert y.shape == (batch, 1, (seq_len - 1) * stride + kernel_size)

    print("KERNEL_OK")
</pallas_src>

<mosaic_0001>
module attributes {stable_mosaic.version = 11 : i64} {
  func.func @kernel(%arg0: i32, %arg1: i32, %arg2: memref<1x32x128xf32, #tpu.memory_space<vmem>>, %arg3: memref<4x32xf32, #tpu.memory_space<vmem>>, %arg4: memref<1xf32, #tpu.memory_space<smem>>, %arg5: memref<1x2x128xf32, #tpu.memory_space<vmem>>, %arg6: memref<2x128xf32, #tpu.memory_space<vmem>>) attributes {dimension_semantics = [#tpu.dimension_semantics<parallel>, #tpu.dimension_semantics<arbitrary>], iteration_bounds = array<i64: 2, 1>, scalar_prefetch = 0 : i64, scratch_operands = 1 : i64, tpu.core_type = #tpu.core_type<tc>, window_params = [{transform_indices = @transform_0, window_bounds = array<i64: 1, 32, 128>}, {pipeline_mode = #tpu.pipeline_mode<synchronous>, transform_indices = @transform_1, window_bounds = array<i64: 4, 32>}, {transform_indices = @transform_2, window_bounds = array<i64: 1>}, {transform_indices = @transform_3, window_bounds = array<i64: 1, 2, 128>}]} {
    %c0_i32 = arith.constant 0 : i32
    %0 = arith.cmpi eq, %arg1, %c0_i32 : i32
    %1 = arith.extui %0 : i1 to i32
    %c0_i32_0 = arith.constant 0 : i32
    %2 = arith.cmpi ne, %1, %c0_i32_0 : i32
    scf.if %2 {
      %cst_19 = arith.constant 0.000000e+00 : f32
      %40 = vector.broadcast %cst_19 : f32 to vector<2x128xf32>
      %c0_20 = arith.constant 0 : index
      %c0_21 = arith.constant 0 : index
      %41 = vector.load %arg6[%c0_20, %c0_21] : memref<2x128xf32, #tpu.memory_space<vmem>>, vector<2x128xf32>
      tpu.vector_store %arg6[%c0_20, %c0_21], %40 {strides = array<i32>} : memref<2x128xf32, #tpu.memory_space<vmem>>, vector<2x128xf32>,
    } else {
    }
    %c0 = arith.constant 0 : index
    %c0_1 = arith.constant 0 : index
    %3 = vector.load %arg3[%c0, %c0_1] : memref<4x32xf32, #tpu.memory_space<vmem>>, vector<4x32xf32>
    %c0_2 = arith.constant 0 : index
    %c0_3 = arith.constant 0 : index
    %c0_4 = arith.constant 0 : index
    %4 = vector.load %arg2[%c0_2, %c0_3, %c0_4] : memref<1x32x128xf32, #tpu.memory_space<vmem>>, vector<1x32x128xf32>
    %5 = vector.shape_cast %4 : vector<1x32x128xf32> to vector<32x128xf32>
    %cst = arith.constant dense<0.000000e+00> : vector<4x128xf32>
    %6 = tpu.matmul %3, %5, %cst {dimension_numbers = #tpu.dot_dimension_numbers<[1], [0], [0], [1], [0, 0, 1, 1], [], []>} : vector<4x32xf32>, vector<32x128xf32>, vector<4x128xf32> -> vector<4x128xf32>
    %7 = tpu.iota {dimensions = array<i32: 1>} : vector<4x128xi32>
    %c128_i32 = arith.constant 128 : i32
    %8 = arith.muli %arg1, %c128_i32 : i32
    %9 = vector.broadcast %8 : i32 to vector<4x128xi32>
    %10 = arith.addi %7, %9 : vector<4x128xi32>
    %c8_i32 = arith.constant 8 : i32
    %11 = vector.broadcast %c8_i32 : i32 to vector<4x128xi32>
    %12 = arith.cmpi slt, %10, %11 : vector<4x128xi32>
    %cst_5 = arith.constant 0.000000e+00 : f32
    %13 = vector.broadcast %cst_5 : f32 to vector<4x128xf32>
    %14 = arith.select %12, %6, %13 : vector<4x128xi1>, vector<4x128xf32>
    %15 = tpu.iota {dimensions = array<i32: 1>} : vector<2x128xi32>
    %16 = tpu.iota {dimensions = array<i32: 1>} : vector<2x128xi32>
    %17 = vector.extract_strided_slice %14 {offsets = [0, 0], sizes = [2, 128], strides = [1, 1]} : vector<4x128xf32> to vector<2x128xf32>
    %cst_6 = arith.constant 0.000000e+00 : f32
    %18 = vector.broadcast %cst_6 : f32 to vector<2x128xf32>
    %19 = vector.extract_strided_slice %14 {offsets = [2, 0], sizes = [2, 128], strides = [1, 1]} : vector<4x128xf32> to vector<2x128xf32>
    %c1_i32 = arith.constant 1 : i32
    %20 = tpu.dynamic_rotate %19 by %c1_i32 dim 1 : vector<2x128xf32>, i32 -> vector<2x128xf32>
    %c1_i32_7 = arith.constant 1 : i32
    %21 = vector.broadcast %c1_i32_7 : i32 to vector<2x128xi32>
    %22 = arith.cmpi sge, %15, %21 : vector<2x128xi32>
    %cst_8 = arith.constant 0.000000e+00 : f32
    %23 = vector.broadcast %cst_8 : f32 to vector<2x128xf32>
    %24 = arith.select %22, %20, %23 : vector<2x128xi1>, vector<2x128xf32>
    %25 = arith.addf %17, %24 : vector<2x128xf32>
    %c1_i32_9 = arith.constant 1 : i32
    %26 = vector.broadcast %c1_i32_9 : i32 to vector<2x128xi32>
    %27 = arith.cmpi slt, %16, %26 : vector<2x128xi32>
    %cst_10 = arith.constant 0.000000e+00 : f32
    %28 = vector.broadcast %cst_10 : f32 to vector<2x128xf32>
    %29 = arith.select %27, %20, %28 : vector<2x128xi1>, vector<2x128xf32>
    %30 = arith.addf %18, %29 : vector<2x128xf32>
    %c0_11 = arith.constant 0 : index
    %c0_12 = arith.constant 0 : index
    %31 = vector.load %arg6[%c0_11, %c0_12] : memref<2x128xf32, #tpu.memory_space<vmem>>, vector<2x128xf32>
    %c0_13 = arith.constant 0 : index
    %c0_14 = arith.constant 0 : index
    %32 = vector.load %arg6[%c0_13, %c0_14] : memref<2x128xf32, #tpu.memory_space<vmem>>, vector<2x128xf32>
    tpu.vector_store %arg6[%c0_13, %c0_14], %30 {strides = array<i32>} : memref<2x128xf32, #tpu.memory_space<vmem>>, vector<2x128xf32>,
    %33 = arith.addf %25, %31 : vector<2x128xf32>
    %c0_15 = arith.constant 0 : index
    %34 = memref.load %arg4[%c0_15] : memref<1xf32, #tpu.memory_space<smem>>
    %35 = vector.broadcast %34 : f32 to vector<2x128xf32>
    %36 = arith.addf %33, %35 : vector<2x128xf32>
    %c0_16 = arith.constant 0 : index
    %c0_17 = arith.constant 0 : index
    %c0_18 = arith.constant 0 : index
    %37 = vector.load %arg5[%c0_16, %c0_17, %c0_18] : memref<1x2x128xf32, #tpu.memory_space<vmem>>, vector<1x2x128xf32>
    %38 = vector.shape_cast %37 : vector<1x2x128xf32> to vector<2x128xf32>
    %39 = vector.shape_cast %36 : vector<2x128xf32> to vector<1x2x128xf32>
    tpu.vector_store %arg5[%c0_16, %c0_17, %c0_18], %39 {strides = array<i32>} : memref<1x2x128xf32, #tpu.memory_space<vmem>>, vector<1x2x128xf32>,
    return
  }
  func.func @transform_0(%arg0: i32, %arg1: i32) -> (i32, i32, i32) {
    %c0_i32 = arith.constant 0 : i32
    %0 = arith.minsi %arg1, %c0_i32 : i32
    %c0_i32_0 = arith.constant 0 : i32
    %c0_i32_1 = arith.constant 0 : i32
    return %arg0, %c0_i32_0, %0 : i32, i32, i32
  }
  func.func @transform_1(%arg0: i32, %arg1: i32) -> (i32, i32) {
    %c0_i32 = arith.constant 0 : i32
    %c0_i32_0 = arith.constant 0 : i32
    %c0_i32_1 = arith.constant 0 : i32
    return %c0_i32, %c0_i32_0 : i32, i32
  }
  func.func @transform_2(%arg0: i32, %arg1: i32) -> i32 {
    %c0_i32 = arith.constant 0 : i32
    %c0_i32_0 = arith.constant 0 : i32
    return %c0_i32 : i32
  }
  func.func @transform_3(%arg0: i32, %arg1: i32) -> (i32, i32, i32) {
    %c0_i32 = arith.constant 0 : i32
    %c0_i32_0 = arith.constant 0 : i32
    return %arg0, %c0_i32, %arg1 : i32, i32, i32
  }
}

</mosaic_0001>

<llo_original>
// kernel: conv_transpose1d_pallas.1
$region0: #{conv_transpose1d_pallas.1}
  #allocation0 [shape = 'u32[]', space=smem, size = 0x4, offset = 0x4, fixed_abs, tag = 'smem constant byte address 0x4 - core index']
  #allocation1 [shape = 'u32[144,128]{1,0:T(1,128)}', space=vmem, size = 0x12000, scoped, tag = 'internal scratch']
  #allocation2 [shape = 'f32[2,128]{1,0:T(2,128)}', space=vmem, size = 0x400, scoped, tag = 'scratch operand']
  #allocation3 [shape = 'f32[1]{0:T(128)S(6)}', space=smem, size = 0x200, scoped, tag = 'scoped memory for conv_transpose1d_pallas.1']
  %s0 = inlined_call_operand.vmem [shape: f32[2,32,128], index: 0, kind: input, shape index: {}]
  %s1 = inlined_call_operand.vmem [shape: f32[4,32], index: 1, kind: input, shape index: {}]
  %s2 = inlined_call_operand.<no memory space> [shape: f32[1], index: 2, kind: input, shape index: {}]
  %s3 = inlined_call_operand.vmem [shape: f32[2,2,128], index: 3, kind: output, shape index: {}]
  %s4 = sld [smem:[#allocation0]]
  $region49: #{conv_transpose1d_pallas.1} parent=0
    _
  %s6 = ssub.s32 1, %s4
  %s7 = scalar_select 0, %s6, %s4
  %8 = sst [smem:[#allocation3]] %s2
  loop: start=0, step=1, limit=4
  $region2: #{conv_transpose1d_pallas.1} parent=0 // loop_pre_header
    _
  $region3: #{conv_transpose1d_pallas.1} parent=0 // loop_header
    %s10 = sphi 0, %s14
    %p11 = scmp.ge.s32.totalorder %s10, 4
    %s17 = sphi 0, %s29
    %s18 = sphi 0, %s25
    %s19 = sphi 0, %s17
    %s20 = sphi 0, %s18
    %s21 = sphi 0, %s19
    %s22 = sphi 0, %s20
    %s38 = sphi 0, %s40
    %s41 = sphi 0, %s38
    %s42 = sphi 0, %s41
    %s58 = sphi 0, %s42
    %s62 = sphi 0, %s62
    %s64 = sphi 0, %s62
    %s65 = sphi 0, %s64
    %s79 = sphi 0, %s65
    %s83 = sphi 0, %s83
    %s85 = sphi 0, %s83
    %s86 = sphi 0, %s85
    %s100 = sphi 0, %s86
    %s108 = sphi 0, %s110
    %s111 = sphi 0, %s108
    %s112 = sphi 0, %s111
    %s128 = sphi 0, %s112
  $region4: #{conv_transpose1d_pallas.1} parent=0 // loop_header_branch
    %13 = sbr.rel (%p11) target = $region8
  $region5: #{conv_transpose1d_pallas.1} parent=0 // loop_body
    %s15 = ssub.s32 %s10, 1
    %s16 = ssub.s32 %s10, 2
    %s23 = sadd.s32 1, %s18
    %p24 = scmp.ge.s32.totalorder %s23, 1
    %s25 = scalar_select %p24, 0, %s23
    %s26 = sadd.s32 1, %s17
    %s27 = scalar_select %p24, %s26, %s17
    %p28 = scmp.ge.s32.totalorder %s27, 2
    %s29 = scalar_select %p28, 0, %s27
    %p30 = scmp.lt.s32.totalorder %s18, 0
    %s31 = scalar_select %p30, %s18, 0
    %p32 = scmp.lt.s32.totalorder %s25, 0
    %s33 = scalar_select %p32, %s25, 0
    %s34 = ssub.s32 %s17, %s29
    %s35 = ssub.s32 %s31, %s33
    %s36 = sor.u32 %s34, %s35
    %p37 = scmp.eq.s32.totalorder %s36, 0
    %s39 = sadd.s32 %s38, 1
    %s40 = scalar_select %p37, %s38, %s39
    %p43 = pneg %p37
    %p44 = scmp.eq.s32.totalorder %s10, 1
    %p45 = por %p43, %p44
    %p46 = scmp.ne.s32.totalorder %s38, %s41
    %p47 = scmp.eq.s32.totalorder %s10, 0
    %p48 = por %p46, %p47
    %p49 = scmp.ne.s32.totalorder %s38, %s41
    %p50 = scmp.eq.s32.totalorder %s15, 1
    %p51 = por %p49, %p50
    %p52 = scmp.ne.s32.totalorder %s41, %s42
    %p53 = scmp.eq.s32.totalorder %s15, 0
    %p54 = por %p52, %p53
    %p55 = scmp.ne.s32.totalorder %s41, %s42
    %p56 = scmp.eq.s32.totalorder %s16, 1
    %p57 = por %p55, %p56
    %p59 = scmp.ne.s32.totalorder %s42, %s58
    %p60 = scmp.eq.s32.totalorder %s16, 0
    %p61 = por %p59, %p60
    %s63 = sadd.s32 %s62, 1
    %p66 = scmp.eq.s32.totalorder %s10, 1
    %p67 = scmp.ne.s32.totalorder %s62, %s64
    %p68 = scmp.eq.s32.totalorder %s10, 0
    %p69 = por %p67, %p68
    %p70 = scmp.ne.s32.totalorder %s62, %s64
    %p71 = scmp.eq.s32.totalorder %s15, 1
    %p72 = por %p70, %p71
    %p73 = scmp.ne.s32.totalorder %s64, %s65
    %p74 = scmp.eq.s32.totalorder %s15, 0
    %p75 = por %p73, %p74
    %p76 = scmp.ne.s32.totalorder %s64, %s65
    %p77 = scmp.eq.s32.totalorder %s16, 1
    %p78 = por %p76, %p77
    %p80 = scmp.ne.s32.totalorder %s65, %s79
    %p81 = scmp.eq.s32.totalorder %s16, 0
    %p82 = por %p80, %p81
    %s84 = sadd.s32 %s83, 1
    %p87 = scmp.eq.s32.totalorder %s10, 1
    %p88 = scmp.ne.s32.totalorder %s83, %s85
    %p89 = scmp.eq.s32.totalorder %s10, 0
    %p90 = por %p88, %p89
    %p91 = scmp.ne.s32.totalorder %s83, %s85
    %p92 = scmp.eq.s32.totalorder %s15, 1
    %p93 = por %p91, %p92
    %p94 = scmp.ne.s32.totalorder %s85, %s86
    %p95 = scmp.eq.s32.totalorder %s15, 0
    %p96 = por %p94, %p95
    %p97 = scmp.ne.s32.totalorder %s85, %s86
    %p98 = scmp.eq.s32.totalorder %s16, 1
    %p99 = por %p97, %p98
    %p101 = scmp.ne.s32.totalorder %s86, %s100
    %p102 = scmp.eq.s32.totalorder %s16, 0
    %p103 = por %p101, %p102
    %s104 = ssub.s32 %s17, %s29
    %s105 = ssub.s32 %s18, %s25
    %s106 = sor.u32 %s104, %s105
    %p107 = scmp.eq.s32.totalorder %s106, 0
    %s109 = sadd.s32 %s108, 1
    %s110 = scalar_select %p107, %s108, %s109
    %p113 = pneg %p107
    %p114 = scmp.eq.s32.totalorder %s10, 1
    %p115 = por %p113, %p114
    %p116 = scmp.ne.s32.totalorder %s108, %s111
    %p117 = scmp.eq.s32.totalorder %s10, 0
    %p118 = por %p116, %p117
    %p119 = scmp.ne.s32.totalorder %s108, %s111
    %p120 = scmp.eq.s32.totalorder %s15, 1
    %p121 = por %p119, %p120
    %p122 = scmp.ne.s32.totalorder %s111, %s112
    %p123 = scmp.eq.s32.totalorder %s15, 0
    %p124 = por %p122, %p123
    %p125 = scmp.ne.s32.totalorder %s111, %s112
    %p126 = scmp.eq.s32.totalorder %s16, 1
    %p127 = por %p125, %p126
    %p129 = scmp.ne.s32.totalorder %s112, %s128
    %p130 = scmp.eq.s32.totalorder %s16, 0
    %p131 = por %p129, %p130
    %p132 = scmp.le.s32.totalorder 1, %s10
    %p133 = scmp.lt.s32.totalorder %s10, 3
    %p134 = pnand %p132, %p133
    %p135 = pneg %p134
    // Predicated region
    $region9: #{conv_transpose1d_pallas.1} parent=5 // pred_check
      _
    $region10: #{conv_transpose1d_pallas.1} parent=5 // pred_check_branch
      %137 = sbr.rel (%p134) target = $region12
    $region11: #{conv_transpose1d_pallas.1} parent=5 // pred_region
      %s138 = ssub.s32 %s10, 1
      // Predicated region
      $region13: #{conv_transpose1d_pallas.1} parent=11 // pred_check
        %p139 = pneg %p75
      $region14: #{conv_transpose1d_pallas.1} parent=11 // pred_check_branch
        %141 = sbr.rel (%p139) target = $region16
      $region15: #{conv_transpose1d_pallas.1} parent=11 // pred_region
        _
      $region16: #{conv_transpose1d_pallas.1} parent=11 // pred_fallthru
        _
      // Predicated region
      $region17: #{conv_transpose1d_pallas.1} parent=11 // pred_check
        %p142 = pneg %p96
      $region18: #{conv_transpose1d_pallas.1} parent=11 // pred_check_branch
        %144 = sbr.rel (%p142) target = $region20
      $region19: #{conv_transpose1d_pallas.1} parent=11 // pred_region
        _
      $region20: #{conv_transpose1d_pallas.1} parent=11 // pred_fallthru
        _
    $region12: #{conv_transpose1d_pallas.1} parent=5 // pred_fallthru
      _
    %p145 = scmp.lt.s32.totalorder %s10, 2
    // Predicated region
    $region21: #{conv_transpose1d_pallas.1} parent=5 // pred_check
      %p146 = pneg %p145
    $region22: #{conv_transpose1d_pallas.1} parent=5 // pred_check_branch
      %148 = sbr.rel (%p146) target = $region24
    $region23: #{conv_transpose1d_pallas.1} parent=5 // pred_region
      // Predicated region
      $region25: #{conv_transpose1d_pallas.1} parent=23 // pred_check
        %p149 = pneg %p48
      $region26: #{conv_transpose1d_pallas.1} parent=23 // pred_check_branch
        %151 = sbr.rel (%p149) target = $region28
      $region27: #{conv_transpose1d_pallas.1} parent=23 // pred_region
        %p152 = scmp.lt.s32.totalorder %s18, 0
        %s153 = scalar_select %p152, %s18, 0
        %p154 = scmp.lt.s32.totalorder %s17, 1
        %s155 = scalar_select %p154, %s17, 1
        %p156 = scmp.lt.s32.totalorder %s153, 0
        %s157 = scalar_select %p156, %s153, 0
        %s158 = smul.addr %s155, 4
        %s159 = sadd.s32 %s157, %s158
        %s160 = smul.addr %s159, 8
        %s161 = scalar_lea.vmem %s0, %s160
        %p162 = scmp.lt.s32.totalorder %s18, 0
        %s163 = scalar_select %p162, %s18, 0
      $region28: #{conv_transpose1d_pallas.1} parent=23 // pred_fallthru
        _
    $region24: #{conv_transpose1d_pallas.1} parent=5 // pred_fallthru
      _
    %p164 = scmp.le.s32.totalorder 1, %s10
    %p165 = scmp.lt.s32.totalorder %s10, 3
    %p166 = pnand %p164, %p165
    %p167 = pneg %p166
    // Predicated region
    $region29: #{conv_transpose1d_pallas.1} parent=5 // pred_check
      _
    $region30: #{conv_transpose1d_pallas.1} parent=5 // pred_check_branch
      %169 = sbr.rel (%p166) target = $region32
    $region31: #{conv_transpose1d_pallas.1} parent=5 // pred_region
      %s170 = ssub.s32 %s10, 1
      %p171 = scmp.lt.s32.totalorder %s20, 0
      %s172 = scalar_select %p171, %s20, 0
      %p173 = scmp.lt.s32.totalorder %s19, 1
      %s174 = scalar_select %p173, %s19, 1
      %p175 = scmp.lt.s32.totalorder %s172, 0
      %s176 = scalar_select %p175, %s172, 0
      %s177 = smul.addr %s174, 4
      %s178 = sadd.s32 %s176, %s177
      %s179 = smul.addr %s178, 8
      %s180 = scalar_lea.vmem %s0, %s179
      %p181 = pneg %p54
      %p182 = pneg %p51
      %p183 = pneg %p75
      %p184 = pneg %p72
      %p185 = pneg %p96
      %p186 = pneg %p93
      %p187 = pneg %p124
      %p188 = pneg %p121
      %p189 = scmp.lt.s32.totalorder %s19, 1
      %s190 = scalar_select %p189, %s19, 1
      %p191 = scmp.lt.s32.totalorder %s20, 0
      %s192 = scalar_select %p191, %s20, 0
      %s193 = sadd.s32 %s192, %s190
      %s194 = smul.addr %s193, 2
      %s195 = scalar_lea.vmem %s3, %s194
      %p196 = scmp.lt.s32.totalorder %s20, 0
      %s197 = scalar_select %p196, %s20, 0
      %p198 = scmp.lt.s32.totalorder %s19, 1
      %s199 = scalar_select %p198, %s19, 1
      %p200 = scmp.lt.s32.totalorder %s197, 0
      %s201 = scalar_select %p200, %s197, 0
      %s202 = smul.addr %s199, 4
      %s203 = sadd.s32 %s201, %s202
      %s204 = smul.addr %s203, 8
      %s205 = scalar_lea.vmem %s0, %s204
      %p206 = scmp.lt.s32.totalorder %s20, 0
      %s207 = scalar_select %p206, %s20, 0
      %p208 = scmp.lt.s32.totalorder %s19, 1
      %s209 = scalar_select %p208, %s19, 1
      %p210 = scmp.lt.s32.totalorder %s20, 0
      %s211 = scalar_select %p210, %s20, 0
      %s212 = sadd.s32 %s211, %s209
      %s213 = smul.addr %s212, 2
      %s214 = scalar_lea.vmem %s3, %s213
      %p215 = scmp.eq.s32.totalorder %s20, 0
      // Predicated region
      $region33: #{conv_transpose1d_pallas.1} parent=31 // pred_check
        %p216 = pneg %p215
      $region34: #{conv_transpose1d_pallas.1} parent=31 // pred_check_branch
        %218 = sbr.rel (%p216) target = $region36
      $region35: #{conv_transpose1d_pallas.1} parent=31 // pred_region
        %219 = vst [vmem:[#allocation2] sm:$0x3] 0.0
      $region36: #{conv_transpose1d_pallas.1} parent=31 // pred_fallthru
        _
      %v220 = vld [vmem:[%s1] sm:$0xf]
      %v221 = vld [vmem:[%s205] sm:$0xff]
      %v222 = vld [vmem:[%s205 + $0x8] sm:$0xff]
      %v223 = vld [vmem:[%s205 + $0x10] sm:$0xff]
      %v224 = vld [vmem:[%s205 + $0x18] sm:$0xff]
      %vm225 = vcmask 261120
      %v227 = vsel %vm225, %v220, 0
      %229 = vmatprep.subr.mxu0 0.0
      %230 = vmatpush1.msra.mxu0 %v221
      %231 = vmatprep.subr.mxu0 0.0
      %232 = vmatpush1.msra.mxu0 %v222
      %233 = vmatprep.subr.mxu0 0.0
      %234 = vmatpush1.msra.mxu0 %v223
      %235 = vmatprep.subr.mxu0 0.0
      %236 = vmatpush1.msra.mxu0 %v224
      %237 = vmatprep.subr.mxu0 0.0
      %238 = vmatpush1.msra.mxu0 0.0
      %239 = vmatprep.subr.mxu0 0.0
      %240 = vmatpush1.msra.mxu0 0.0
      %241 = vmatprep.subr.mxu0 0.0
      %242 = vmatpush1.msra.mxu0 0.0
      %243 = vmatprep.subr.mxu0 0.0
      %244 = vmatpush1.msra.mxu0 0.0
      %245 = vmatprep.subr.mxu0 0.0
      %246 = vmatpush1.msra.mxu0 0.0
      %247 = vmatprep.subr.mxu0 0.0
      %248 = vmatpush1.msra.mxu0 0.0
      %249 = vmatprep.subr.mxu0 0.0
      %250 = vmatpush1.msra.mxu0 0.0
      %251 = vmatprep.subr.mxu0 0.0
      %252 = vmatpush1.msra.mxu0 0.0
      %253 = vmatprep.subr.mxu0 0.0
      %254 = vmatpush1.msra.mxu0 0.0
      %255 = vmatprep.subr.mxu0 0.0
      %256 = vmatpush1.msra.mxu0 0.0
      %257 = vmatprep.subr.mxu0 0.0
      %258 = vmatpush1.msra.mxu0 0.0
      %259 = vmatprep.subr.mxu0 0.0
      %260 = vmatpush1.msra.mxu0 0.0
      %261 = vmatprep.subr.mxu0 0.0
      %262 = vmatpush1.msra.mxu0 0.0
      %263 = vmatprep.subr.mxu0 0.0
      %264 = vmatpush1.msra.mxu0 0.0
      %265 = vmatprep.subr.mxu0 0.0
      %266 = vmatpush1.msra.mxu0 0.0
      %267 = vmatprep.subr.mxu0 0.0
      %268 = vmatpush1.msra.mxu0 0.0
      %269 = vmatprep.subr.mxu0 0.0
      %270 = vmatpush1.msra.mxu0 0.0
      %271 = vmatprep.subr.mxu0 0.0
      %272 = vmatpush1.msra.mxu0 0.0
      %273 = vmatprep.subr.mxu0 0.0
      %274 = vmatpush1.msra.mxu0 0.0
      %275 = vmatprep.subr.mxu0 0.0
      %276 = vmatpush1.msra.mxu0 0.0
      %277 = vmatprep.subr.mxu0 0.0
      %278 = vmatpush1.msra.mxu0 0.0
      %279 = vmatprep.subr.mxu0 0.0
      %280 = vmatpush1.msra.mxu0 0.0
      %281 = vmatprep.subr.mxu0 0.0
      %282 = vmatpush1.msra.mxu0 0.0
      %283 = vmatprep.subr.mxu0 0.0
      %284 = vmatpush1.msra.mxu0 0.0
      %285 = vmatprep.subr.mxu0 0.0
      %286 = vmatpush1.msra.mxu0 0.0
      %287 = vmatprep.subr.mxu0 0.0
      %288 = vmatpush1.msra.mxu0 0.0
      %289 = vmatprep.subr.mxu0 0.0
      %290 = vmatpush1.msra.mxu0 0.0
      %291 = vmatprep.subr.mxu0 0.0
      %292 = vmatpush1.msra.mxu0 0.0
      %293 = vmatprep.mubr.f32.mxu0 0.0
      %294 = vmatmul.mubr.f32.gmra.mrb[0].mxu0 %v227
      %v295 = vpop.f32.mrb[0].mxu0
      %v296 = vadd.f32 0.0, %v295
      %v297 = vpop.f32.mrb[0].mxu0
      %298 = vdwg.mxu0
      %v299 = vlaneseq
      %v300 = vand.u32 %v299, 127
      %s301 = smul.u32 %s20, 128
      %v302 = vstv %s301
      %v303 = vadd.s32 %v300, %v302
      %vm304 = vcmp.lt.s32.totalorder %v303, 8
      %v305 = vsel %vm304, %v296, 0.0
      %v307 = vrot.slane %v305, 2
      %309 = vrot.lane.b32.xlu0 %v307, 1
      %v310 = vpop.permute.xlu0 %309
      %vm311 = vcmp.ge.s32.totalorder %v300, 1
      %v312 = vsel %vm311, %v310, 0.0
      %v313 = vadd.f32 %v305, %v312
      %vm314 = vcmp.lt.s32.totalorder %v300, 1
      %v315 = vsel %vm314, %v310, 0.0
      %v316 = vadd.f32 %v315, 0.0
      %v317 = vld [vmem:[#allocation2] sm:$0x3]
      %318 = vst [vmem:[#allocation2] sm:$0x3] %v316
      %v319 = vadd.f32 %v313, %v317
      %s320 = sld [smem:[#allocation3]]
      %v321 = vstv %s320
      %v322 = vadd.f32 %v319, %v321
      %323 = vst [vmem:[%s214] sm:$0x3] %v322
      %p324 = scmp.lt.s32.totalorder %s19, 1
      %s325 = scalar_select %p324, %s19, 1
      %p326 = scmp.lt.s32.totalorder %s20, 0
      %s327 = scalar_select %p326, %s20, 0
      %s328 = sadd.s32 %s327, %s325
      %s329 = smul.addr %s328, 2
      %s330 = scalar_lea.vmem %s3, %s329
      // Predicated region
      $region37: #{conv_transpose1d_pallas.1} parent=31 // pred_check
        %p331 = pneg %p121
      $region38: #{conv_transpose1d_pallas.1} parent=31 // pred_check_branch
        %333 = sbr.rel (%p331) target = $region40
      $region39: #{conv_transpose1d_pallas.1} parent=31 // pred_region
        _
      $region40: #{conv_transpose1d_pallas.1} parent=31 // pred_fallthru
        _
    $region32: #{conv_transpose1d_pallas.1} parent=5 // pred_fallthru
      _
    %p334 = scmp.le.s32.totalorder 2, %s10
    // Predicated region
    $region41: #{conv_transpose1d_pallas.1} parent=5 // pred_check
      %p335 = pneg %p334
    $region42: #{conv_transpose1d_pallas.1} parent=5 // pred_check_branch
      %337 = sbr.rel (%p335) target = $region44
    $region43: #{conv_transpose1d_pallas.1} parent=5 // pred_region
      %s338 = ssub.s32 %s10, 2
      // Predicated region
      $region45: #{conv_transpose1d_pallas.1} parent=43 // pred_check
        %p339 = pneg %p127
      $region46: #{conv_transpose1d_pallas.1} parent=43 // pred_check_branch
        %341 = sbr.rel (%p339) target = $region48
      $region47: #{conv_transpose1d_pallas.1} parent=43 // pred_region
        %p342 = scmp.lt.s32.totalorder %s21, 1
        %s343 = scalar_select %p342, %s21, 1
        %p344 = scmp.lt.s32.totalorder %s22, 0
        %s345 = scalar_select %p344, %s22, 0
        %s346 = sadd.s32 %s345, %s343
        %s347 = smul.addr %s346, 2
        %s348 = scalar_lea.vmem %s3, %s347
      $region48: #{conv_transpose1d_pallas.1} parent=43 // pred_fallthru
        _
    $region44: #{conv_transpose1d_pallas.1} parent=5 // pred_fallthru
      _
  $region6: #{conv_transpose1d_pallas.1} parent=0 // loop_footer
    %s14 = sadd.s32 1, %s10
  $region7: #{conv_transpose1d_pallas.1} parent=0 // loop_footer_branch
    %9 = sbr.rel target = $region3
  $region8: #{conv_transpose1d_pallas.1} parent=0 // loop_exit
    _

</llo_original>
